<compile_context>
chip_gen: v7x
topology: tpu7x:2x2x1
jax: 0.10.0
libtpu: 0.0.40
codegen_flags: <defaults>
</compile_context>

<pallas_src>
import functools

import jax
import jax.numpy as jnp
from jax.experimental import pallas as pl
from jax.experimental.pallas import tpu as pltpu

LANE = 128        # TPU lane width (last dim)
TILE_B_MAX = 256  # fills the 256-wide MXU M dim on v6e/v7x
SUBLANE_BF16 = 16 # bf16 packs 16 rows per vreg sublane group


def _round_up(n, m):
    return ((n + m - 1) // m) * m


def _choose_tile_b(batch):
    """Batch-tile size.

    Big batches -> 256-row tiles (full MXU M dim on v6e/v7x, >=2 grid tiles for
    batch >= 512 so v7x's two TensorCores both get work).  Small batches -> one
    sublane-aligned tile to avoid padding waste."""
    return min(TILE_B_MAX, _round_up(max(batch, 1), SUBLANE_BF16))


# --------------------------------------------------------------------------- #
# Kernel: one batch tile of the 2-layer MLP.                                  #
# bf16 operands into the MXU, f32 accumulation, bias+ReLU in f32 on the VPU.  #
# --------------------------------------------------------------------------- #
def mlp_kernel(x_ref, w1_ref, b1_ref, w2_ref, b2_ref, o_ref):
    # Layer 1: (TILE_B, D) bf16 @ (D, H_pad) bf16 -> f32
    h = jnp.dot(x_ref[...], w1_ref[...], preferred_element_type=jnp.float32)
    h = jnp.maximum(h + b1_ref[...], 0.0)
    # Layer 2: (TILE_B, H_pad) bf16 @ (H_pad, C_pad) bf16 -> f32
    o = jnp.dot(h.astype(jnp.bfloat16), w2_ref[...],
                preferred_element_type=jnp.float32)
    o = jnp.maximum(o + b2_ref[...], 0.0)
    o_ref[...] = o  # lane-dense (TILE_B, 128) unmasked f32 store


def mlp_logits_pallas(x_bf, w1, b1, w2, b2, tile_b):
    """x_bf: (B_pad, num_inputs) bf16 (batch padded to a tile_b multiple, feature
    dim NOT padded). Weights pre-padded/lane-aligned. Returns (B_pad, C_pad) f32."""
    B_pad, D = x_bf.shape
    H_pad = w1.shape[1]
    C_pad = w2.shape[1]
    grid = (B_pad // tile_b,)
    return pl.pallas_call(
        mlp_kernel,
        out_shape=jax.ShapeDtypeStruct((B_pad, C_pad), jnp.float32),
        grid_spec=pltpu.PrefetchScalarGridSpec(
            num_scalar_prefetch=0,
            grid=grid,
            in_specs=[
                # x tile: last dim = full (unpadded) feature width -> legal block
                pl.BlockSpec((tile_b, D), lambda i: (i, 0)),
                pl.BlockSpec((D, H_pad), lambda i: (0, 0)),     # w1 (resident)
                pl.BlockSpec((1, H_pad), lambda i: (0, 0)),     # b1
                pl.BlockSpec((H_pad, C_pad), lambda i: (0, 0)), # w2 (resident)
                pl.BlockSpec((1, C_pad), lambda i: (0, 0)),     # b2
            ],
            out_specs=pl.BlockSpec((tile_b, C_pad), lambda i: (i, 0)),
        ),
        compiler_params=pltpu.CompilerParams(
            dimension_semantics=("parallel",),  # independent batch tiles (megacore)
        ),
    )(x_bf, w1, b1, w2, b2)


# --------------------------------------------------------------------------- #
# Jitted end-to-end forward: pad batch, run kernel, slice, argmax on-device.  #
# --------------------------------------------------------------------------- #
@functools.partial(jax.jit, static_argnums=(5, 6))
def predict(x, w1, b1, w2, b2, num_inputs, num_outputs):
    B = x.shape[0]
    tile_b = _choose_tile_b(B)
    B_pad = _round_up(B, tile_b)
    x_bf = x.astype(jnp.bfloat16)
    if B_pad != B:
        # Only the batch dim is padded; padded rows are sliced off below.
        x_bf = jnp.zeros((B_pad, num_inputs), jnp.bfloat16).at[:B].set(x_bf)
    logits_pad = mlp_logits_pallas(x_bf, w1, b1, w2, b2, tile_b)
    logits = logits_pad[:B, :num_outputs]
    idx = jnp.argmax(logits, axis=1).astype(jnp.int32)
    return logits, idx


def nn_forward(x, padded_params, num_inputs, num_outputs):
    """Single-sample string API matching the PyTorch module's forward().

    The Python-string return forces exactly one device->host sync (argmax .item()
    in the original module); batched callers should use `predict` directly."""
    w1, b1, w2, b2 = padded_params
    _, idx = predict(x, w1, b1, w2, b2, num_inputs, num_outputs)
    result = int(idx[0])
    if result == 0:
        return 'K_UP'
    elif result == 1:
        return 'K_DOWN'
    return 'K_NO'


# --------------------------------------------------------------------------- #
# Parameter init mirroring nn.Linear's U(-1/sqrt(fan_in), 1/sqrt(fan_in)).    #
# Stored pre-transposed (in, out); hidden/output dims zero-padded to 128      #
# lanes; weight matrices stored in bf16, biases in f32.                       #
# --------------------------------------------------------------------------- #
def init_params(key, num_inputs, num_outputs):
    num_hidden = int(num_inputs * 2 / 3 + num_outputs)
    H_pad = _round_up(num_hidden, LANE)
    C_pad = _round_up(num_outputs, LANE)

    k1, k2, k3, k4 = jax.random.split(key, 4)
    bound1 = 1.0 / jnp.sqrt(num_inputs)
    bound2 = 1.0 / jnp.sqrt(num_hidden)
    w1 = jax.random.uniform(k1, (num_inputs, num_hidden), jnp.float32, -bound1, bound1)
    b1 = jax.random.uniform(k2, (num_hidden,), jnp.float32, -bound1, bound1)
    w2 = jax.random.uniform(k3, (num_hidden, num_outputs), jnp.float32, -bound2, bound2)
    b2 = jax.random.uniform(k4, (num_outputs,), jnp.float32, -bound2, bound2)

    # Zero padding keeps the math exact: padded hidden lanes are ReLU(0+0)=0 and hit
    # zero rows of w2; padded output lanes are sliced off.  Feature dim is NOT padded.
    w1_p = (jnp.zeros((num_inputs, H_pad), jnp.float32)
            .at[:, :num_hidden].set(w1).astype(jnp.bfloat16))
    b1_p = jnp.zeros((1, H_pad), jnp.float32).at[0, :num_hidden].set(b1)
    w2_p = (jnp.zeros((H_pad, C_pad), jnp.float32)
            .at[:num_hidden, :num_outputs].set(w2).astype(jnp.bfloat16))
    b2_p = jnp.zeros((1, C_pad), jnp.float32).at[0, :num_outputs].set(b2)

    padded = (w1_p, b1_p, w2_p, b2_p)
    logical = (w1, b1, w2, b2)
    return padded, logical, num_hidden


def ref_forward(x, w1, b1, w2, b2):
    """Pure-JAX reference with the same bf16-matmul / f32-accumulate math."""
    h = jnp.dot(x.astype(jnp.bfloat16), w1.astype(jnp.bfloat16),
                preferred_element_type=jnp.float32) + b1
    h = jnp.maximum(h, 0.0)
    o = jnp.dot(h.astype(jnp.bfloat16), w2.astype(jnp.bfloat16),
                preferred_element_type=jnp.float32) + b2
    return jnp.maximum(o, 0.0)


if __name__ == "__main__":
    num_inputs = 32
    num_outputs = 3

    key = jax.random.PRNGKey(0)
    pkey, xkey_a, xkey_b = jax.random.split(key, 3)
    padded_params, logical_params, num_hidden = init_params(pkey, num_inputs, num_outputs)
    w1p, b1p, w2p, b2p = padded_params
    w1, b1, w2, b2 = logical_params

    # Two batch sizes: a small one (single tile) and a larger one that exercises the
    # multi-tile grid path (tile_b=256, grid=(2,) -> both v7x TensorCores busy).
    for batch, xkey in ((16, xkey_a), (512, xkey_b)):
        x = jax.random.normal(xkey, (batch, num_inputs), dtype=jnp.float32)
        logits, idx = predict(x, w1p, b1p, w2p, b2p, num_inputs, num_outputs)
        jax.block_until_ready((logits, idx))

        ref = ref_forward(x, w1, b1, w2, b2)
        assert jnp.allclose(logits, ref, atol=1e-4, rtol=1e-4), \
            f"kernel mismatch vs reference (batch={batch})"
        assert jnp.array_equal(idx, jnp.argmax(ref, axis=1).astype(jnp.int32)), \
            f"argmax mismatch vs reference (batch={batch})"

    # Single-sample string API matching the original module's forward().
    x1 = jax.random.normal(xkey_a, (1, num_inputs), dtype=jnp.float32)
    action = nn_forward(x1, padded_params, num_inputs, num_outputs)
    assert action in ('K_UP', 'K_DOWN', 'K_NO')

    print("KERNEL_OK")
</pallas_src>

<mosaic_0001>
module attributes {stable_mosaic.version = 11 : i64} {
  func.func @mlp_kernel(%arg0: i32, %arg1: memref<16x32xbf16, #tpu.memory_space<vmem>>, %arg2: memref<32x128xbf16, #tpu.memory_space<vmem>>, %arg3: memref<1x128xf32, #tpu.memory_space<vmem>>, %arg4: memref<128x128xbf16, #tpu.memory_space<vmem>>, %arg5: memref<1x128xf32, #tpu.memory_space<vmem>>, %arg6: memref<16x128xf32, #tpu.memory_space<vmem>>) attributes {dimension_semantics = [#tpu.dimension_semantics<parallel>], iteration_bounds = array<i64: 1>, scalar_prefetch = 0 : i64, scratch_operands = 0 : i64, tpu.core_type = #tpu.core_type<tc>, window_params = [{transform_indices = @transform_0, window_bounds = array<i64: 16, 32>}, {pipeline_mode = #tpu.pipeline_mode<synchronous>, transform_indices = @transform_1, window_bounds = array<i64: 32, 128>}, {pipeline_mode = #tpu.pipeline_mode<synchronous>, transform_indices = @transform_2, window_bounds = array<i64: 1, 128>}, {pipeline_mode = #tpu.pipeline_mode<synchronous>, transform_indices = @transform_3, window_bounds = array<i64: 128, 128>}, {pipeline_mode = #tpu.pipeline_mode<synchronous>, transform_indices = @transform_4, window_bounds = array<i64: 1, 128>}, {transform_indices = @transform_5, window_bounds = array<i64: 16, 128>}]} {
    %c0 = arith.constant 0 : index
    %c0_0 = arith.constant 0 : index
    %0 = vector.load %arg1[%c0, %c0_0] : memref<16x32xbf16, #tpu.memory_space<vmem>>, vector<16x32xbf16>
    %c0_1 = arith.constant 0 : index
    %c0_2 = arith.constant 0 : index
    %1 = vector.load %arg2[%c0_1, %c0_2] : memref<32x128xbf16, #tpu.memory_space<vmem>>, vector<32x128xbf16>
    %cst = arith.constant dense<0.000000e+00> : vector<16x128xf32>
    %2 = tpu.matmul %0, %1, %cst {dimension_numbers = #tpu.dot_dimension_numbers<[1], [0], [0], [1], [0, 0, 1, 1], [], []>} : vector<16x32xbf16>, vector<32x128xbf16>, vector<16x128xf32> -> vector<16x128xf32>
    %c0_3 = arith.constant 0 : index
    %c0_4 = arith.constant 0 : index
    %3 = vector.load %arg3[%c0_3, %c0_4] : memref<1x128xf32, #tpu.memory_space<vmem>>, vector<1x128xf32>
    %4 = vector.broadcast %3 : vector<1x128xf32> to vector<16x128xf32>
    %5 = arith.addf %2, %4 : vector<16x128xf32>
    %cst_5 = arith.constant 0.000000e+00 : f32
    %6 = vector.broadcast %cst_5 : f32 to vector<16x128xf32>
    %7 = arith.maximumf %5, %6 : vector<16x128xf32>
    %8 = arith.truncf %7 : vector<16x128xf32> to vector<16x128xbf16>
    %c0_6 = arith.constant 0 : index
    %c0_7 = arith.constant 0 : index
    %9 = vector.load %arg4[%c0_6, %c0_7] : memref<128x128xbf16, #tpu.memory_space<vmem>>, vector<128x128xbf16>
    %cst_8 = arith.constant dense<0.000000e+00> : vector<16x128xf32>
    %10 = tpu.matmul %8, %9, %cst_8 {dimension_numbers = #tpu.dot_dimension_numbers<[1], [0], [0], [1], [0, 0, 1, 1], [], []>} : vector<16x128xbf16>, vector<128x128xbf16>, vector<16x128xf32> -> vector<16x128xf32>
    %c0_9 = arith.constant 0 : index
    %c0_10 = arith.constant 0 : index
    %11 = vector.load %arg5[%c0_9, %c0_10] : memref<1x128xf32, #tpu.memory_space<vmem>>, vector<1x128xf32>
    %12 = vector.broadcast %11 : vector<1x128xf32> to vector<16x128xf32>
    %13 = arith.addf %10, %12 : vector<16x128xf32>
    %cst_11 = arith.constant 0.000000e+00 : f32
    %14 = vector.broadcast %cst_11 : f32 to vector<16x128xf32>
    %15 = arith.maximumf %13, %14 : vector<16x128xf32>
    %c0_12 = arith.constant 0 : index
    %c0_13 = arith.constant 0 : index
    %16 = vector.load %arg6[%c0_12, %c0_13] : memref<16x128xf32, #tpu.memory_space<vmem>>, vector<16x128xf32>
    tpu.vector_store %arg6[%c0_12, %c0_13], %15 {strides = array<i32>} : memref<16x128xf32, #tpu.memory_space<vmem>>, vector<16x128xf32>,
    return
  }
  func.func @transform_0(%arg0: i32) -> (i32, i32) {
    %c0_i32 = arith.constant 0 : i32
    %c0_i32_0 = arith.constant 0 : i32
    return %arg0, %c0_i32 : i32, i32
  }
  func.func @transform_1(%arg0: i32) -> (i32, i32) {
    %c0_i32 = arith.constant 0 : i32
    %c0_i32_0 = arith.constant 0 : i32
    %c0_i32_1 = arith.constant 0 : i32
    return %c0_i32, %c0_i32_0 : i32, i32
  }
  func.func @transform_2(%arg0: i32) -> (i32, i32) {
    %c0_i32 = arith.constant 0 : i32
    %c0_i32_0 = arith.constant 0 : i32
    %c0_i32_1 = arith.constant 0 : i32
    return %c0_i32, %c0_i32_0 : i32, i32
  }
  func.func @transform_3(%arg0: i32) -> (i32, i32) {
    %c0_i32 = arith.constant 0 : i32
    %c0_i32_0 = arith.constant 0 : i32
    %c0_i32_1 = arith.constant 0 : i32
    return %c0_i32, %c0_i32_0 : i32, i32
  }
  func.func @transform_4(%arg0: i32) -> (i32, i32) {
    %c0_i32 = arith.constant 0 : i32
    %c0_i32_0 = arith.constant 0 : i32
    %c0_i32_1 = arith.constant 0 : i32
    return %c0_i32, %c0_i32_0 : i32, i32
  }
  func.func @transform_5(%arg0: i32) -> (i32, i32) {
    %c0_i32 = arith.constant 0 : i32
    %c0_i32_0 = arith.constant 0 : i32
    return %arg0, %c0_i32 : i32, i32
  }
}

</mosaic_0001>

<llo_original>
// kernel: predict.1
$region0: #{predict.1}
  #allocation0 [shape = 'u32[]', space=smem, size = 0x4, offset = 0x4, fixed_abs, tag = 'smem constant byte address 0x4 - core index']
  #allocation1 [shape = 'u32[144,128]{1,0:T(1,128)}', space=vmem, size = 0x12000, scoped, tag = 'internal scratch']
  %s0 = inlined_call_operand.vmem [shape: bf16[16,32], index: 0, kind: input, shape index: {}]
  %s1 = inlined_call_operand.vmem [shape: bf16[32,128], index: 1, kind: input, shape index: {}]
  %s2 = inlined_call_operand.vmem [shape: f32[1,128], index: 2, kind: input, shape index: {}]
  %s3 = inlined_call_operand.hbm [shape: bf16[128,128], index: 3, kind: input, shape index: {}]
  %s4 = inlined_call_operand.vmem [shape: f32[1,128], index: 4, kind: input, shape index: {}]
  %s5 = inlined_call_operand.vmem [shape: f32[16,128], index: 5, kind: output, shape index: {}]
  %s6 = sld [smem:[#allocation0]]
  $region34: #{predict.1} parent=0
    _
  %s8 = ssub.s32 1, %s6
  %s9 = scalar_select 0, %s8, %s6
  $region1: #{predict.1} parent=0
    #allocation2 [shape = 'u8[32768]{0}', space=vmem, size = 0x8000, scoped, tag = 'input window, operand 3, single buffered']
    #allocation3 [shape = 's32[1]{0}', space=sflag, size = 0x4, scoped, tag = 'scoped memory for predict.1']
    %10 = vsyncpa [#allocation3], 0
    // Predicated region
    $region2: #{predict.1} parent=1 // pred_check
      _
    $region3: #{predict.1} parent=1 // pred_check_branch
      %12 = sbr.rel (0) target = $region5
    $region4: #{predict.1} parent=1 // pred_region
      _
    $region5: #{predict.1} parent=1 // pred_fallthru
      _
    // Predicated region
    $region6: #{predict.1} parent=1 // pred_check
      _
    $region7: #{predict.1} parent=1 // pred_check_branch
      %14 = sbr.rel (0) target = $region9
    $region8: #{predict.1} parent=1 // pred_region
      _
    $region9: #{predict.1} parent=1 // pred_fallthru
      _
    // Predicated region
    $region10: #{predict.1} parent=1 // pred_check
      _
    $region11: #{predict.1} parent=1 // pred_check_branch
      %16 = sbr.rel (0) target = $region13
    $region12: #{predict.1} parent=1 // pred_region
      _
    $region13: #{predict.1} parent=1 // pred_fallthru
      _
    // Predicated region
    $region14: #{predict.1} parent=1 // pred_check
      _
    $region15: #{predict.1} parent=1 // pred_check_branch
      %18 = sbr.rel (0) target = $region17
    $region16: #{predict.1} parent=1 // pred_region
      %s20 = ssub.s32 1024, 1024
      %21 = vsyncadd [#allocation3], %s20
      %s22 = sshll.u32 [#allocation2], 4
      %s23 = int_to_ptr.vmem [resolvable:$true] %s22
      %28 = dma.hbm_to_vmem [thread:$0]  %s3, 1024, %s23, [#allocation3], 64, 64, 4
    $region17: #{predict.1} parent=1 // pred_fallthru
      _
    // Predicated region
    $region18: #{predict.1} parent=1 // pred_check
      _
    $region19: #{predict.1} parent=1 // pred_check_branch
      %30 = sbr.rel (0) target = $region21
    $region20: #{predict.1} parent=1 // pred_region
      _
    $region21: #{predict.1} parent=1 // pred_fallthru
      _
    // Predicated region
    $region22: #{predict.1} parent=1 // pred_check
      _
    $region23: #{predict.1} parent=1 // pred_check_branch
      %32 = sbr.rel (0) target = $region25
    $region24: #{predict.1} parent=1 // pred_region
      %33 = dma.done [#allocation3], 1024
    $region25: #{predict.1} parent=1 // pred_fallthru
      _
    %v35 = vld [vmem:[%s0] sm:$0xf]
    %v36 = vld [vmem:[%s0 + $0x4] sm:$0xf]
    %v37 = vld [vmem:[%s1] sm:$0xf]
    %v38 = vld [vmem:[%s1 + $0x4] sm:$0xf]
    %v39 = vld [vmem:[%s1 + $0x8] sm:$0xf]
    %v40 = vld [vmem:[%s1 + $0xc] sm:$0xf]
    %v41 = vld [vmem:[%s2] sm:$0x1]
    %v43 = vlaneseq
    %v44 = vshrl.u32 %v43, 7
    %v45 = vsub.s32 0, %v44
    %v46 = vrot.slane %v41, %v45
    %v50 = vunpack.c.l.b16 %v35
    %v51 = vunpack.c.l.b16 %v36
    %v52 = vpack.c.b16 %v51, %v50
    %v57 = vunpack.c.l.b16 %v37
    %v58 = vunpack.c.l.b16 %v38
    %v59 = vunpack.c.l.b16 %v39
    %v60 = vunpack.c.l.b16 %v40
    %v61 = vpack.c.b16 %v58, %v57
    %v62 = vpack.c.b16 %v60, %v59
    %vm65 = vcmask 261120
    %v67 = vsel %vm65, %v52, 0
    %69 = vmatprep.subr.bf16.mxu0 0
    %70 = vmatpush1.bf16.msra.mxu0 %v61
    %71 = vmatprep.subr.bf16.mxu0 0
    %72 = vmatpush1.bf16.msra.mxu0 %v62
    %73 = vmatprep.subr.bf16.mxu0 0
    %74 = vmatpush1.bf16.msra.mxu0 0
    %75 = vmatprep.subr.bf16.mxu0 0
    %76 = vmatpush1.bf16.msra.mxu0 0
    %77 = vmatprep.subr.bf16.mxu0 0
    %78 = vmatpush1.bf16.msra.mxu0 0
    %79 = vmatprep.subr.bf16.mxu0 0
    %80 = vmatpush1.bf16.msra.mxu0 0
    %81 = vmatprep.subr.bf16.mxu0 0
    %82 = vmatpush1.bf16.msra.mxu0 0
    %83 = vmatprep.subr.bf16.mxu0 0
    %84 = vmatpush1.bf16.msra.mxu0 0
    %85 = vmatprep.subr.bf16.mxu0 0
    %86 = vmatpush1.bf16.msra.mxu0 0
    %87 = vmatprep.subr.bf16.mxu0 0
    %88 = vmatpush1.bf16.msra.mxu0 0
    %89 = vmatprep.subr.bf16.mxu0 0
    %90 = vmatpush1.bf16.msra.mxu0 0
    %91 = vmatprep.subr.bf16.mxu0 0
    %92 = vmatpush1.bf16.msra.mxu0 0
    %93 = vmatprep.subr.bf16.mxu0 0
    %94 = vmatpush1.bf16.msra.mxu0 0
    %95 = vmatprep.subr.bf16.mxu0 0
    %96 = vmatpush1.bf16.msra.mxu0 0
    %97 = vmatprep.subr.bf16.mxu0 0
    %98 = vmatpush1.bf16.msra.mxu0 0
    %99 = vmatprep.subr.bf16.mxu0 0
    %100 = vmatpush1.bf16.msra.mxu0 0
    %101 = vmatprep.mubr.bf16.mxu0 0
    %102 = vmatmul.mubr.bf16.gmra.mrb[0].mxu0 %v67
    %v103 = vpop.f32.mrb[0].mxu0
    %v104 = vadd.f32 %v46, %v103
    %v105 = vpop.f32.mrb[0].mxu0
    %v106 = vpop.f32.mrb[0].mxu0
    %v107 = vadd.f32 %v46, %v106
    %v108 = vpop.f32.mrb[0].mxu0
    %109 = vdwg.mxu0
    %v110 = vmax.f32 %v104, 0.0
    %v111 = vmax.f32 %v107, 0.0
    %v112 = vpack.c.bf16 %v111, %v110
    %v113 = vld [vmem:[#allocation2] sm:$0xf]
    %v114 = vld [vmem:[#allocation2 + $0x4] sm:$0xf]
    %v115 = vld [vmem:[#allocation2 + $0x8] sm:$0xf]
    %v116 = vld [vmem:[#allocation2 + $0xc] sm:$0xf]
    %v117 = vld [vmem:[#allocation2 + $0x10] sm:$0xf]
    %v118 = vld [vmem:[#allocation2 + $0x14] sm:$0xf]
    %v119 = vld [vmem:[#allocation2 + $0x18] sm:$0xf]
    %v120 = vld [vmem:[#allocation2 + $0x1c] sm:$0xf]
    %v121 = vld [vmem:[#allocation2 + $0x20] sm:$0xf]
    %v122 = vld [vmem:[#allocation2 + $0x24] sm:$0xf]
    %v123 = vld [vmem:[#allocation2 + $0x28] sm:$0xf]
    %v124 = vld [vmem:[#allocation2 + $0x2c] sm:$0xf]
    %v125 = vld [vmem:[#allocation2 + $0x30] sm:$0xf]
    %v126 = vld [vmem:[#allocation2 + $0x34] sm:$0xf]
    %v127 = vld [vmem:[#allocation2 + $0x38] sm:$0xf]
    %v128 = vld [vmem:[#allocation2 + $0x3c] sm:$0xf]
    %v129 = vld [vmem:[%s4] sm:$0x1]
    %v131 = vlaneseq
    %v132 = vshrl.u32 %v131, 7
    %v133 = vsub.s32 0, %v132
    %v134 = vrot.slane %v129, %v133
    %v152 = vunpack.c.l.b16 %v113
    %v153 = vunpack.c.l.b16 %v114
    %v154 = vunpack.c.l.b16 %v115
    %v155 = vunpack.c.l.b16 %v116
    %v156 = vunpack.c.l.b16 %v117
    %v157 = vunpack.c.l.b16 %v118
    %v158 = vunpack.c.l.b16 %v119
    %v159 = vunpack.c.l.b16 %v120
    %v160 = vunpack.c.l.b16 %v121
    %v161 = vunpack.c.l.b16 %v122
    %v162 = vunpack.c.l.b16 %v123
    %v163 = vunpack.c.l.b16 %v124
    %v164 = vunpack.c.l.b16 %v125
    %v165 = vunpack.c.l.b16 %v126
    %v166 = vunpack.c.l.b16 %v127
    %v167 = vunpack.c.l.b16 %v128
    %v168 = vpack.c.b16 %v153, %v152
    %v169 = vpack.c.b16 %v155, %v154
    %v170 = vpack.c.b16 %v157, %v156
    %v171 = vpack.c.b16 %v159, %v158
    %v172 = vpack.c.b16 %v161, %v160
    %v173 = vpack.c.b16 %v163, %v162
    %v174 = vpack.c.b16 %v165, %v164
    %v175 = vpack.c.b16 %v167, %v166
    %184 = vmatprep.subr.bf16.mxu0 0
    %185 = vmatpush1.bf16.msra.mxu0 %v168
    %186 = vmatprep.subr.bf16.mxu0 0
    %187 = vmatpush1.bf16.msra.mxu0 %v169
    %188 = vmatprep.subr.bf16.mxu0 0
    %189 = vmatpush1.bf16.msra.mxu0 %v170
    %190 = vmatprep.subr.bf16.mxu0 0
    %191 = vmatpush1.bf16.msra.mxu0 %v171
    %192 = vmatprep.subr.bf16.mxu0 0
    %193 = vmatpush1.bf16.msra.mxu0 %v172
    %194 = vmatprep.subr.bf16.mxu0 0
    %195 = vmatpush1.bf16.msra.mxu0 %v173
    %196 = vmatprep.subr.bf16.mxu0 0
    %197 = vmatpush1.bf16.msra.mxu0 %v174
    %198 = vmatprep.subr.bf16.mxu0 0
    %199 = vmatpush1.bf16.msra.mxu0 %v175
    %200 = vmatprep.subr.bf16.mxu0 0
    %201 = vmatpush1.bf16.msra.mxu0 0
    %202 = vmatprep.subr.bf16.mxu0 0
    %203 = vmatpush1.bf16.msra.mxu0 0
    %204 = vmatprep.subr.bf16.mxu0 0
    %205 = vmatpush1.bf16.msra.mxu0 0
    %206 = vmatprep.subr.bf16.mxu0 0
    %207 = vmatpush1.bf16.msra.mxu0 0
    %208 = vmatprep.subr.bf16.mxu0 0
    %209 = vmatpush1.bf16.msra.mxu0 0
    %210 = vmatprep.subr.bf16.mxu0 0
    %211 = vmatpush1.bf16.msra.mxu0 0
    %212 = vmatprep.subr.bf16.mxu0 0
    %213 = vmatpush1.bf16.msra.mxu0 0
    %214 = vmatprep.subr.bf16.mxu0 0
    %215 = vmatpush1.bf16.msra.mxu0 0
    %216 = vmatprep.mubr.bf16.mxu0 0
    %217 = vmatmul.mubr.bf16.gmra.mrb[0].mxu0 %v112
    %v218 = vpop.f32.mrb[0].mxu0
    %v219 = vadd.f32 %v134, %v218
    %v220 = vpop.f32.mrb[0].mxu0
    %v221 = vpop.f32.mrb[0].mxu0
    %v222 = vadd.f32 %v134, %v221
    %v223 = vpop.f32.mrb[0].mxu0
    %224 = vdwg.mxu0
    %v225 = vmax.f32 %v219, 0.0
    %v226 = vmax.f32 %v222, 0.0
    %227 = vst [vmem:[%s5] sm:$0xff] %v225
    %228 = vst [vmem:[%s5 + $0x8] sm:$0xff] %v226
    // Predicated region
    $region26: #{predict.1} parent=1 // pred_check
      _
    $region27: #{predict.1} parent=1 // pred_check_branch
      %230 = sbr.rel (0) target = $region29
    $region28: #{predict.1} parent=1 // pred_region
      _
    $region29: #{predict.1} parent=1 // pred_fallthru
      _
    // Predicated region
    $region30: #{predict.1} parent=1 // pred_check
      _
    $region31: #{predict.1} parent=1 // pred_check_branch
      %232 = sbr.rel (0) target = $region33
    $region32: #{predict.1} parent=1 // pred_region
      _
    $region33: #{predict.1} parent=1 // pred_fallthru
      _
    %233 = vsyncpa [#allocation3], 1

</llo_original>
